<compile_context>
chip_gen: v7x
topology: tpu7x:2x2x1
jax: 0.10.0
libtpu: 0.0.40
codegen_flags: <defaults>
</compile_context>

<pallas_src>
import functools

import numpy as np
import jax
import jax.numpy as jnp
from jax.experimental import pallas as pl
from jax.experimental.pallas import tpu as pltpu


def _lace_kernel(adj_ref, logits_ref, labels_ref, acc_ref, *,
                 hw, tile, n_t, tiles_per_part, num_classes, ragged):
    """One grid step handles one (batch, parallel-part, hw-tile) block.

    adj_ref    : (1, C, 1)     f32      tau * log(priors + 1e-8), resident (const index map)
    logits_ref : (1, C, tile)  f32/bf16 logits block (classes on sublanes, voxels on lanes)
    labels_ref : (1, 1, tile)  int      class ids (any integer dtype; cast in VMEM)
    acc_ref    : (1, 1, tile)  f32      per-(batch, part) lane-dense partial-sum accumulator
    """
    p = pl.program_id(1)
    t = pl.program_id(2)

    @pl.when(t == 0)
    def _init():
        acc_ref[...] = jnp.zeros_like(acc_ref)

    x = logits_ref[...].astype(jnp.float32)            # (1, C, tile)
    x = x + adj_ref[...]                               # logit adjustment (lane broadcast)
    lab = labels_ref[...].astype(jnp.int32)            # (1, 1, tile)

    # numerically stable logsumexp over the class (sublane) axis
    m = jnp.max(x, axis=1, keepdims=True)              # (1, 1, tile)
    s = jnp.sum(jnp.exp(x - m), axis=1, keepdims=True)
    lse = m + jnp.log(s)

    # x' at the label class via iota compare (== get_soft_label one-hot select)
    cls_ids = jax.lax.broadcasted_iota(jnp.int32, x.shape, 1)
    x_lab = jnp.sum(jnp.where(cls_ids == lab, x, 0.0), axis=1, keepdims=True)

    # out-of-range / ignore labels contribute 0, exactly like the reference one-hot
    valid = jnp.logical_and(lab >= 0, lab < num_classes)
    ce = jnp.where(valid, lse - x_lab, 0.0)            # (1, 1, tile)

    if not ragged:
        acc_ref[...] += ce                             # plain VPU add, no masks
    else:
        gt = p * tiles_per_part + t                    # global hw-tile index

        @pl.when(gt != n_t - 1)
        def _full_tile():
            acc_ref[...] += ce

        @pl.when(gt == n_t - 1)
        def _last_tile():
            # mask lanes past HW; this must stay *after* the per-lane lse so any
            # garbage in the padded lanes is discarded by the select, never summed
            lane = jax.lax.broadcasted_iota(jnp.int32, ce.shape, 2)
            acc_ref[...] += jnp.where(gt * tile + lane < hw, ce, 0.0)


def lace_loss(predict, labels, priors, tau=1.0, tile_hw=131072,
              vmem_limit_bytes=48 * 1024 * 1024):
    """predict: [B, C, H, W] float logits (NCHW, f32 or bf16);
       labels : [B, H, W] integer class ids (any int dtype; passed through unchanged)."""
    B, C, H, W = predict.shape
    HW = H * W
    N = B * HW

    # per-class adjustment: tau * log(priors + 1e-8)
    adj = (tau * np.log(np.asarray(priors, dtype=np.float64) + 1e-8)).astype(np.float32)
    adj = jnp.asarray(adj).reshape(1, C, 1)

    # NCHW-native views: pure reshapes — no transpose, no pad, no dtype round trip in HBM.
    logits = predict.reshape(B, C, HW)
    labs = labels.reshape(B, 1, HW)                    # native dtype; cast happens in-kernel

    # lane-dense tile along the voxel axis; cap the logits block at ~4 MiB so
    # double-buffered inputs + Mosaic temporaries stay inside scoped VMEM on
    # every generation (v5e 16 MiB default ... v7x 64 MiB physical).
    logit_bytes = jnp.dtype(predict.dtype).itemsize
    label_bytes = jnp.dtype(labels.dtype).itemsize
    max_lanes = max(128, (((4 * 1024 * 1024) // (C * logit_bytes)) // 128) * 128)
    tile_cap = max(128, min(int(tile_hw), max_lanes))
    tile = HW if HW <= tile_cap else (tile_cap // 128) * 128
    n_t = pl.cdiv(HW, tile)
    ragged = (HW % tile) != 0

    # Split the voxel tiles into two "parallel" parts so both v7x TensorCores are
    # fed even when B is 1 / odd; a harmless sequential loop on single-TC v5e/v6e.
    P = 2 if (n_t >= 2 and n_t % 2 == 0) else 1
    tpp = n_t // P

    cost = pl.CostEstimate(
        flops=8 * N * C,
        transcendentals=N * (C + 1),
        bytes_accessed=N * C * logit_bytes + N * label_bytes + B * P * tile * 4 + C * 4,
    )

    kernel = functools.partial(
        _lace_kernel, hw=HW, tile=tile, n_t=n_t,
        tiles_per_part=tpp, num_classes=C, ragged=ragged)

    partial = pl.pallas_call(
        kernel,
        out_shape=jax.ShapeDtypeStruct((B * P, 1, tile), jnp.float32),
        grid=(B, P, tpp),
        in_specs=[
            pl.BlockSpec((1, C, 1), lambda b, p, t: (0, 0, 0)),            # adj (resident)
            pl.BlockSpec((1, C, tile), lambda b, p, t, tpp=tpp: (b, 0, p * tpp + t)),
            pl.BlockSpec((1, 1, tile), lambda b, p, t, tpp=tpp: (b, 0, p * tpp + t)),
        ],
        out_specs=pl.BlockSpec((1, 1, tile), lambda b, p, t, P=P: (b * P + p, 0, 0)),
        compiler_params=pltpu.CompilerParams(
            dimension_semantics=("parallel", "parallel", "arbitrary"),
            vmem_limit_bytes=int(vmem_limit_bytes)),
        cost_estimate=cost,
    )(adj, logits, labs)

    # final scalar reduce + mean over all voxels (torch.mean in the reference)
    return jnp.sum(partial) / jnp.float32(N)


def _reference_loss(predict, labels, priors, tau, cls_num):
    """Pure-JAX reference mirroring the PyTorch LACE module."""
    lp = jnp.log(jnp.asarray(priors, jnp.float32) + 1e-8)
    x = jnp.transpose(predict, (0, 2, 3, 1)).reshape(-1, cls_num)
    x = (x + tau * lp[None, :]).astype(jnp.float32)
    p = jax.nn.softmax(x, axis=-1)
    onehot = jax.nn.one_hot(labels.reshape(-1), cls_num, dtype=jnp.float32)
    ce = -jnp.sum(onehot * jnp.log(p), axis=-1)
    return jnp.mean(ce)


if __name__ == "__main__":
    key = jax.random.PRNGKey(0)
    k1, k2, k3, k4, k5, k6 = jax.random.split(key, 6)

    priors = [0.1, 0.2, 0.3, 0.4]
    tau = 1.0
    C = 4

    # Case 1: base — f32 logits, single tile per batch, batch-parallel only.
    B, H, W = 2, 16, 16
    pred1 = jax.random.normal(k1, (B, C, H, W), dtype=jnp.float32)
    lab1 = jax.random.randint(k2, (B, H, W), 0, C, dtype=jnp.int32)
    out1 = jax.block_until_ready(lace_loss(pred1, lab1, priors, tau=tau))
    ref1 = _reference_loss(pred1, lab1, priors, tau, C)
    assert jnp.allclose(out1, ref1, rtol=1e-5, atol=1e-5), (out1, ref1)

    # Case 2: B=1, even tile count -> exercises the second "parallel" HW split (P=2).
    B, H, W = 1, 16, 32
    pred2 = jax.random.normal(k3, (B, C, H, W), dtype=jnp.float32)
    lab2 = jax.random.randint(k4, (B, H, W), 0, C, dtype=jnp.int32)
    out2 = jax.block_until_ready(lace_loss(pred2, lab2, priors, tau=tau, tile_hw=128))
    ref2 = _reference_loss(pred2, lab2, priors, tau, C)
    assert jnp.allclose(out2, ref2, rtol=1e-5, atol=1e-5), (out2, ref2)

    # Case 3: bf16 logits + ragged last tile (HW=288, tile=128, n_t=3 odd -> P=1).
    B, H, W = 2, 16, 18
    pred3 = jax.random.normal(k5, (B, C, H, W), dtype=jnp.bfloat16)
    lab3 = jax.random.randint(k6, (B, H, W), 0, C, dtype=jnp.int32)
    out3 = jax.block_until_ready(lace_loss(pred3, lab3, priors, tau=tau, tile_hw=128))
    ref3 = _reference_loss(pred3, lab3, priors, tau, C)
    assert jnp.allclose(out3, ref3, rtol=1e-4, atol=1e-5), (out3, ref3)

    print("KERNEL_OK")
</pallas_src>

<mosaic_0001>
module attributes {stable_mosaic.version = 11 : i64} {
  func.func @_lace_kernel(%arg0: i32, %arg1: i32, %arg2: i32, %arg3: memref<1x4x1xf32, #tpu.memory_space<vmem>>, %arg4: memref<1x4x256xf32, #tpu.memory_space<vmem>>, %arg5: memref<1x1x256xi32, #tpu.memory_space<vmem>>, %arg6: memref<1x1x256xf32, #tpu.memory_space<vmem>>) attributes {dimension_semantics = [#tpu.dimension_semantics<parallel>, #tpu.dimension_semantics<parallel>, #tpu.dimension_semantics<arbitrary>], iteration_bounds = array<i64: 2, 1, 1>, scalar_prefetch = 0 : i64, scratch_operands = 0 : i64, tpu.core_type = #tpu.core_type<tc>, window_params = [{pipeline_mode = #tpu.pipeline_mode<synchronous>, transform_indices = @transform_0, window_bounds = array<i64: 1, 4, 1>}, {transform_indices = @transform_1, window_bounds = array<i64: 1, 4, 256>}, {transform_indices = @transform_2, window_bounds = array<i64: 1, 1, 256>}, {transform_indices = @transform_3, window_bounds = array<i64: 1, 1, 256>}]} {
    %c0_i32 = arith.constant 0 : i32
    %0 = arith.cmpi eq, %arg2, %c0_i32 : i32
    %1 = arith.extui %0 : i1 to i32
    %c0_i32_0 = arith.constant 0 : i32
    %2 = arith.cmpi ne, %1, %c0_i32_0 : i32
    scf.if %2 {
      %cst_20 = arith.constant 0.000000e+00 : f32
      %35 = vector.broadcast %cst_20 : f32 to vector<1x1x256xf32>
      %c0_21 = arith.constant 0 : index
      %c0_22 = arith.constant 0 : index
      %c0_23 = arith.constant 0 : index
      %36 = vector.load %arg6[%c0_21, %c0_22, %c0_23] : memref<1x1x256xf32, #tpu.memory_space<vmem>>, vector<1x1x256xf32>
      tpu.vector_store %arg6[%c0_21, %c0_22, %c0_23], %35 {strides = array<i32>} : memref<1x1x256xf32, #tpu.memory_space<vmem>>, vector<1x1x256xf32>,
    } else {
    }
    %c0 = arith.constant 0 : index
    %c0_1 = arith.constant 0 : index
    %c0_2 = arith.constant 0 : index
    %3 = vector.load %arg4[%c0, %c0_1, %c0_2] : memref<1x4x256xf32, #tpu.memory_space<vmem>>, vector<1x4x256xf32>
    %c0_3 = arith.constant 0 : index
    %c0_4 = arith.constant 0 : index
    %c0_5 = arith.constant 0 : index
    %4 = vector.load %arg3[%c0_3, %c0_4, %c0_5] : memref<1x4x1xf32, #tpu.memory_space<vmem>>, vector<1x4x1xf32>
    %5 = vector.broadcast %4 : vector<1x4x1xf32> to vector<1x4x256xf32>
    %6 = arith.addf %3, %5 : vector<1x4x256xf32>
    %c0_6 = arith.constant 0 : index
    %c0_7 = arith.constant 0 : index
    %c0_8 = arith.constant 0 : index
    %7 = vector.load %arg5[%c0_6, %c0_7, %c0_8] : memref<1x1x256xi32, #tpu.memory_space<vmem>>, vector<1x1x256xi32>
    %cst = arith.constant dense<0xFF800000> : vector<1x256xf32>
    %8 = vector.multi_reduction <maximumf>, %6, %cst [1] : vector<1x4x256xf32> to vector<1x256xf32>
    %9 = vector.shape_cast %8 : vector<1x256xf32> to vector<1x1x256xf32>
    %10 = vector.broadcast %9 : vector<1x1x256xf32> to vector<1x4x256xf32>
    %11 = arith.subf %6, %10 : vector<1x4x256xf32>
    %12 = math.exp %11 : vector<1x4x256xf32>
    %cst_9 = arith.constant dense<0.000000e+00> : vector<1x256xf32>
    %13 = vector.multi_reduction <add>, %12, %cst_9 [1] : vector<1x4x256xf32> to vector<1x256xf32>
    %14 = vector.shape_cast %13 : vector<1x256xf32> to vector<1x1x256xf32>
    %15 = math.log %14 : vector<1x1x256xf32>
    %16 = arith.addf %9, %15 : vector<1x1x256xf32>
    %17 = tpu.iota {dimensions = array<i32: 1>} : vector<1x4x256xi32>
    %18 = vector.broadcast %7 : vector<1x1x256xi32> to vector<1x4x256xi32>
    %19 = arith.cmpi eq, %17, %18 : vector<1x4x256xi32>
    %cst_10 = arith.constant 0.000000e+00 : f32
    %20 = vector.broadcast %cst_10 : f32 to vector<1x4x256xf32>
    %21 = arith.select %19, %6, %20 : vector<1x4x256xi1>, vector<1x4x256xf32>
    %cst_11 = arith.constant dense<0.000000e+00> : vector<1x256xf32>
    %22 = vector.multi_reduction <add>, %21, %cst_11 [1] : vector<1x4x256xf32> to vector<1x256xf32>
    %23 = vector.shape_cast %22 : vector<1x256xf32> to vector<1x1x256xf32>
    %c0_i32_12 = arith.constant 0 : i32
    %24 = vector.broadcast %c0_i32_12 : i32 to vector<1x1x256xi32>
    %25 = arith.cmpi sge, %7, %24 : vector<1x1x256xi32>
    %c4_i32 = arith.constant 4 : i32
    %26 = vector.broadcast %c4_i32 : i32 to vector<1x1x256xi32>
    %27 = arith.cmpi slt, %7, %26 : vector<1x1x256xi32>
    %28 = arith.andi %25, %27 : vector<1x1x256xi1>
    %29 = arith.subf %16, %23 : vector<1x1x256xf32>
    %cst_13 = arith.constant 0.000000e+00 : f32
    %30 = vector.broadcast %cst_13 : f32 to vector<1x1x256xf32>
    %31 = arith.select %28, %29, %30 : vector<1x1x256xi1>, vector<1x1x256xf32>
    %c0_14 = arith.constant 0 : index
    %c0_15 = arith.constant 0 : index
    %c0_16 = arith.constant 0 : index
    %32 = vector.load %arg6[%c0_14, %c0_15, %c0_16] : memref<1x1x256xf32, #tpu.memory_space<vmem>>, vector<1x1x256xf32>
    %33 = arith.addf %32, %31 : vector<1x1x256xf32>
    %c0_17 = arith.constant 0 : index
    %c0_18 = arith.constant 0 : index
    %c0_19 = arith.constant 0 : index
    %34 = vector.load %arg6[%c0_17, %c0_18, %c0_19] : memref<1x1x256xf32, #tpu.memory_space<vmem>>, vector<1x1x256xf32>
    tpu.vector_store %arg6[%c0_17, %c0_18, %c0_19], %33 {strides = array<i32>} : memref<1x1x256xf32, #tpu.memory_space<vmem>>, vector<1x1x256xf32>,
    return
  }
  func.func @transform_0(%arg0: i32, %arg1: i32, %arg2: i32) -> (i32, i32, i32) {
    %c0_i32 = arith.constant 0 : i32
    %c0_i32_0 = arith.constant 0 : i32
    %c0_i32_1 = arith.constant 0 : i32
    %c0_i32_2 = arith.constant 0 : i32
    return %c0_i32, %c0_i32_0, %c0_i32_1 : i32, i32, i32
  }
  func.func @transform_1(%arg0: i32, %arg1: i32, %arg2: i32) -> (i32, i32, i32) {
    %c1_i32 = arith.constant 1 : i32
    %0 = arith.muli %arg1, %c1_i32 : i32
    %1 = arith.addi %0, %arg2 : i32
    %c0_i32 = arith.constant 0 : i32
    %c0_i32_0 = arith.constant 0 : i32
    return %arg0, %c0_i32, %1 : i32, i32, i32
  }
  func.func @transform_2(%arg0: i32, %arg1: i32, %arg2: i32) -> (i32, i32, i32) {
    %c1_i32 = arith.constant 1 : i32
    %0 = arith.muli %arg1, %c1_i32 : i32
    %1 = arith.addi %0, %arg2 : i32
    %c0_i32 = arith.constant 0 : i32
    %c0_i32_0 = arith.constant 0 : i32
    return %arg0, %c0_i32, %1 : i32, i32, i32
  }
  func.func @transform_3(%arg0: i32, %arg1: i32, %arg2: i32) -> (i32, i32, i32) {
    %c1_i32 = arith.constant 1 : i32
    %0 = arith.muli %arg0, %c1_i32 : i32
    %1 = arith.addi %0, %arg1 : i32
    %c0_i32 = arith.constant 0 : i32
    %c0_i32_0 = arith.constant 0 : i32
    %c0_i32_1 = arith.constant 0 : i32
    return %1, %c0_i32, %c0_i32_0 : i32, i32, i32
  }
}

</mosaic_0001>

<llo_original>
// kernel: tpu_custom_call.1
$region0: #{tpu_custom_call.1}
  #allocation0 [shape = 'u32[]', space=smem, size = 0x4, offset = 0x4, fixed_abs, tag = 'smem constant byte address 0x4 - core index']
  #allocation1 [shape = 'u32[144,128]{1,0:T(1,128)}', space=vmem, size = 0x12000, scoped, tag = 'internal scratch']
  %s0 = inlined_call_operand.vmem [shape: f32[1,4,1], index: 0, kind: input, shape index: {}]
  %s1 = inlined_call_operand.hbm [shape: f32[2,4,256], index: 1, kind: input, shape index: {}]
  %s2 = inlined_call_operand.vmem [shape: s32[2,1,256], index: 2, kind: input, shape index: {}]
  %s3 = inlined_call_operand.hbm [shape: f32[2,1,256], index: 3, kind: output, shape index: {}]
  %s4 = sld [smem:[#allocation0]]
  $region53: #{tpu_custom_call.1} parent=0
    _
  %s6 = ssub.s32 1, %s4
  %s7 = scalar_select 0, %s6, %s4
  $region1: #{tpu_custom_call.1} parent=0
    #allocation2 [shape = 'u8[8192]{0}', space=vmem, size = 0x2000, scoped, tag = 'input window, operand 1']
    #allocation3 [shape = 's32[2]{0}', space=sflag, size = 0x8, scoped, tag = 'scoped memory for tpu_custom_call.1']
    #allocation4 [shape = 's32[2]{0}', space=sflag, size = 0x8, scoped, tag = 'scoped memory for tpu_custom_call.1']
    #allocation5 [shape = 'u8[2048]{0}', space=vmem, size = 0x800, scoped, tag = 'output window, operand 0']
    %8 = vsyncpa [#allocation3], 0
    %s9 = scalar_lea.sflag [#allocation3], 1
    %10 = vsyncpa %s9, 0
    %11 = vsyncpa [#allocation4], 0
    %s12 = scalar_lea.sflag [#allocation4], 1
    %13 = vsyncpa %s12, 0
    loop: start=0, step=1, limit=4
    $region2: #{tpu_custom_call.1} parent=1 // loop_pre_header
      _
    $region3: #{tpu_custom_call.1} parent=1 // loop_header
      %s15 = sphi 0, %s19
      %p16 = scmp.ge.s32.totalorder %s15, 4
      %s22 = sphi 0, %s41
      %s23 = sphi 0, %s37
      %s24 = sphi 0, %s33
      %s25 = sphi 0, %s22
      %s26 = sphi 0, %s23
      %s27 = sphi 0, %s24
      %s28 = sphi 0, %s25
      %s29 = sphi 0, %s26
      %s30 = sphi 0, %s27
      %s42 = sphi 0, %s42
      %s44 = sphi 0, %s42
      %s45 = sphi 0, %s44
      %s59 = sphi 0, %s45
      %s69 = sphi 0, %s71
      %s72 = sphi 0, %s69
      %s73 = sphi 0, %s72
      %s89 = sphi 0, %s73
      %s99 = sphi 0, %s101
      %s102 = sphi 0, %s99
      %s103 = sphi 0, %s102
      %s119 = sphi 0, %s103
      %s127 = sphi 0, %s129
      %s130 = sphi 0, %s127
      %s131 = sphi 0, %s130
      %s147 = sphi 0, %s131
    $region4: #{tpu_custom_call.1} parent=1 // loop_header_branch
      %18 = sbr.rel (%p16) target = $region8
    $region5: #{tpu_custom_call.1} parent=1 // loop_body
      %s20 = ssub.s32 %s15, 1
      %s21 = ssub.s32 %s15, 2
      %s31 = sadd.s32 1, %s24
      %p32 = scmp.ge.s32.totalorder %s31, 1
      %s33 = scalar_select %p32, 0, %s31
      %s34 = sadd.s32 1, %s23
      %s35 = scalar_select %p32, %s34, %s23
      %p36 = scmp.ge.s32.totalorder %s35, 1
      %s37 = scalar_select %p36, 0, %s35
      %s38 = sadd.s32 1, %s22
      %s39 = scalar_select %p36, %s38, %s22
      %p40 = scmp.ge.s32.totalorder %s39, 2
      %s41 = scalar_select %p40, 0, %s39
      %s43 = sadd.s32 %s42, 1
      %p46 = scmp.eq.s32.totalorder %s15, 1
      %p47 = scmp.ne.s32.totalorder %s42, %s44
      %p48 = scmp.eq.s32.totalorder %s15, 0
      %p49 = por %p47, %p48
      %p50 = scmp.ne.s32.totalorder %s42, %s44
      %p51 = scmp.eq.s32.totalorder %s20, 1
      %p52 = por %p50, %p51
      %p53 = scmp.ne.s32.totalorder %s44, %s45
      %p54 = scmp.eq.s32.totalorder %s20, 0
      %p55 = por %p53, %p54
      %p56 = scmp.ne.s32.totalorder %s44, %s45
      %p57 = scmp.eq.s32.totalorder %s21, 1
      %p58 = por %p56, %p57
      %p60 = scmp.ne.s32.totalorder %s45, %s59
      %p61 = scmp.eq.s32.totalorder %s21, 0
      %p62 = por %p60, %p61
      %s63 = sadd.s32 %s23, %s24
      %s64 = sadd.s32 %s37, %s33
      %s65 = ssub.s32 %s22, %s41
      %s66 = ssub.s32 %s63, %s64
      %s67 = sor.u32 %s65, %s66
      %p68 = scmp.eq.s32.totalorder %s67, 0
      %s70 = sadd.s32 %s69, 1
      %s71 = scalar_select %p68, %s69, %s70
      %p74 = pneg %p68
      %p75 = scmp.eq.s32.totalorder %s15, 1
      %p76 = por %p74, %p75
      %p77 = scmp.ne.s32.totalorder %s69, %s72
      %p78 = scmp.eq.s32.totalorder %s15, 0
      %p79 = por %p77, %p78
      %p80 = scmp.ne.s32.totalorder %s69, %s72
      %p81 = scmp.eq.s32.totalorder %s20, 1
      %p82 = por %p80, %p81
      %p83 = scmp.ne.s32.totalorder %s72, %s73
      %p84 = scmp.eq.s32.totalorder %s20, 0
      %p85 = por %p83, %p84
      %p86 = scmp.ne.s32.totalorder %s72, %s73
      %p87 = scmp.eq.s32.totalorder %s21, 1
      %p88 = por %p86, %p87
      %p90 = scmp.ne.s32.totalorder %s73, %s89
      %p91 = scmp.eq.s32.totalorder %s21, 0
      %p92 = por %p90, %p91
      %s93 = sadd.s32 %s23, %s24
      %s94 = sadd.s32 %s37, %s33
      %s95 = ssub.s32 %s22, %s41
      %s96 = ssub.s32 %s93, %s94
      %s97 = sor.u32 %s95, %s96
      %p98 = scmp.eq.s32.totalorder %s97, 0
      %s100 = sadd.s32 %s99, 1
      %s101 = scalar_select %p98, %s99, %s100
      %p104 = pneg %p98
      %p105 = scmp.eq.s32.totalorder %s15, 1
      %p106 = por %p104, %p105
      %p107 = scmp.ne.s32.totalorder %s99, %s102
      %p108 = scmp.eq.s32.totalorder %s15, 0
      %p109 = por %p107, %p108
      %p110 = scmp.ne.s32.totalorder %s99, %s102
      %p111 = scmp.eq.s32.totalorder %s20, 1
      %p112 = por %p110, %p111
      %p113 = scmp.ne.s32.totalorder %s102, %s103
      %p114 = scmp.eq.s32.totalorder %s20, 0
      %p115 = por %p113, %p114
      %p116 = scmp.ne.s32.totalorder %s102, %s103
      %p117 = scmp.eq.s32.totalorder %s21, 1
      %p118 = por %p116, %p117
      %p120 = scmp.ne.s32.totalorder %s103, %s119
      %p121 = scmp.eq.s32.totalorder %s21, 0
      %p122 = por %p120, %p121
      %s123 = sadd.s32 %s22, %s23
      %s124 = sadd.s32 %s41, %s37
      %s125 = ssub.s32 %s123, %s124
      %p126 = scmp.eq.s32.totalorder %s125, 0
      %s128 = sadd.s32 %s127, 1
      %s129 = scalar_select %p126, %s127, %s128
      %p132 = pneg %p126
      %p133 = scmp.eq.s32.totalorder %s15, 1
      %p134 = por %p132, %p133
      %p135 = scmp.ne.s32.totalorder %s127, %s130
      %p136 = scmp.eq.s32.totalorder %s15, 0
      %p137 = por %p135, %p136
      %p138 = scmp.ne.s32.totalorder %s127, %s130
      %p139 = scmp.eq.s32.totalorder %s20, 1
      %p140 = por %p138, %p139
      %p141 = scmp.ne.s32.totalorder %s130, %s131
      %p142 = scmp.eq.s32.totalorder %s20, 0
      %p143 = por %p141, %p142
      %p144 = scmp.ne.s32.totalorder %s130, %s131
      %p145 = scmp.eq.s32.totalorder %s21, 1
      %p146 = por %p144, %p145
      %p148 = scmp.ne.s32.totalorder %s131, %s147
      %p149 = scmp.eq.s32.totalorder %s21, 0
      %p150 = por %p148, %p149
      %p151 = scmp.le.s32.totalorder 1, %s15
      %p152 = scmp.lt.s32.totalorder %s15, 3
      %p153 = pnand %p151, %p152
      %p154 = pneg %p153
      // Predicated region
      $region9: #{tpu_custom_call.1} parent=5 // pred_check
        _
      $region10: #{tpu_custom_call.1} parent=5 // pred_check_branch
        %156 = sbr.rel (%p153) target = $region12
      $region11: #{tpu_custom_call.1} parent=5 // pred_region
        %s157 = ssub.s32 %s15, 1
        // Predicated region
        $region13: #{tpu_custom_call.1} parent=11 // pred_check
          %p158 = pneg %p55
        $region14: #{tpu_custom_call.1} parent=11 // pred_check_branch
          %160 = sbr.rel (%p158) target = $region16
        $region15: #{tpu_custom_call.1} parent=11 // pred_region
          _
        $region16: #{tpu_custom_call.1} parent=11 // pred_fallthru
          _
      $region12: #{tpu_custom_call.1} parent=5 // pred_fallthru
        _
      %p161 = scmp.lt.s32.totalorder %s15, 2
      // Predicated region
      $region17: #{tpu_custom_call.1} parent=5 // pred_check
        %p162 = pneg %p161
      $region18: #{tpu_custom_call.1} parent=5 // pred_check_branch
        %164 = sbr.rel (%p162) target = $region20
      $region19: #{tpu_custom_call.1} parent=5 // pred_region
        // Predicated region
        $region21: #{tpu_custom_call.1} parent=19 // pred_check
          %p165 = pneg %p79
        $region22: #{tpu_custom_call.1} parent=19 // pred_check_branch
          %167 = sbr.rel (%p165) target = $region24
        $region23: #{tpu_custom_call.1} parent=19 // pred_region
          %s168 = sand.u32 %s69, 1
          %s169 = scalar_lea.sflag [#allocation3], %s168
          %s170 = sand.u32 %s69, 1
          %s171 = smul.addr %s170, 8
          %s172 = scalar_lea.vmem [#allocation2], %s171
          %s173 = sadd.s32 %s23, %s24
          %s174 = smul.u32 2, %s173
          %s176 = ssub.s32 128, 128
          %177 = vsyncadd %s169, %s176
          %s178 = smul.addr %s22, 2
          %s179 = sadd.s32 %s174, %s178
          %s180 = smul.addr %s179, 64
          %s181 = scalar_lea.hbm %s1, %s180
          %s183 = sshll.u32 %s172, 4
          %s184 = int_to_ptr.vmem [resolvable:$true] %s183
          %186 = dma.hbm_to_vmem [thread:$0]  %s181, 128, %s184, %s169
        $region24: #{tpu_custom_call.1} parent=19 // pred_fallthru
          _
        // Predicated region
        $region25: #{tpu_custom_call.1} parent=19 // pred_check
          %p187 = pneg %p109
        $region26: #{tpu_custom_call.1} parent=19 // pred_check_branch
          %189 = sbr.rel (%p187) target = $region28
        $region27: #{tpu_custom_call.1} parent=19 // pred_region
          %s190 = sadd.s32 %s23, %s24
          %s191 = smul.u32 2, %s190
          %p192 = scmp.lt.s32.totalorder %s22, 1
          %s193 = scalar_select %p192, %s22, 1
          %p194 = scmp.lt.s32.totalorder %s191, 1
          %s195 = scalar_select %p194, %s191, 1
          %s196 = smul.addr %s193, 2
          %s197 = sadd.s32 %s195, %s196
          %s198 = scalar_lea.vmem %s2, %s197
          %s199 = sadd.s32 %s23, %s24
          %s200 = smul.u32 2, %s199
        $region28: #{tpu_custom_call.1} parent=19 // pred_fallthru
          _
      $region20: #{tpu_custom_call.1} parent=5 // pred_fallthru
        _
      %p201 = scmp.le.s32.totalorder 1, %s15
      %p202 = scmp.lt.s32.totalorder %s15, 3
      %p203 = pnand %p201, %p202
      %p204 = pneg %p203
      // Predicated region
      $region29: #{tpu_custom_call.1} parent=5 // pred_check
        _
      $region30: #{tpu_custom_call.1} parent=5 // pred_check_branch
        %206 = sbr.rel (%p203) target = $region32
      $region31: #{tpu_custom_call.1} parent=5 // pred_region
        %s207 = ssub.s32 %s15, 1
        %s208 = sand.u32 %s72, 1
        %s209 = scalar_lea.sflag [#allocation3], %s208
        %s210 = sand.u32 %s72, 1
        %s211 = smul.addr %s210, 8
        %s212 = scalar_lea.vmem [#allocation2], %s211
        // Predicated region
        $region33: #{tpu_custom_call.1} parent=31 // pred_check
          %p213 = pneg %p85
        $region34: #{tpu_custom_call.1} parent=31 // pred_check_branch
          %215 = sbr.rel (%p213) target = $region36
        $region35: #{tpu_custom_call.1} parent=31 // pred_region
          %216 = dma.done %s209, 128
        $region36: #{tpu_custom_call.1} parent=31 // pred_fallthru
          _
        %p217 = pneg %p55
        %p218 = pneg %p52
        %s219 = sand.u32 %s72, 1
        %s220 = scalar_lea.sflag [#allocation3], %s219
        %s221 = sand.u32 %s72, 1
        %s222 = smul.addr %s221, 8
        %s223 = scalar_lea.vmem [#allocation2], %s222
        %p224 = pneg %p85
        %p225 = pneg %p82
        %s226 = sadd.s32 %s26, %s27
        %s227 = smul.u32 2, %s226
        %p228 = scmp.lt.s32.totalorder %s25, 1
        %s229 = scalar_select %p228, %s25, 1
        %p230 = scmp.lt.s32.totalorder %s227, 1
        %s231 = scalar_select %p230, %s227, 1
        %s232 = smul.addr %s229, 2
        %s233 = sadd.s32 %s231, %s232
        %s234 = scalar_lea.vmem %s2, %s233
        %p235 = pneg %p115
        %p236 = pneg %p112
        %p237 = pneg %p143
        %p238 = pneg %p140
        %s239 = sand.u32 %s130, 1
        %s240 = scalar_lea.sflag [#allocation4], %s239
        %s241 = sand.u32 %s130, 1
        %s242 = smul.addr %s241, 2
        %s243 = scalar_lea.vmem [#allocation5], %s242
        %s244 = sadd.s32 %s26, %s27
        %s245 = smul.u32 2, %s244
        %s246 = sadd.s32 %s26, %s27
        %s247 = smul.u32 2, %s246
        %p248 = scmp.lt.s32.totalorder %s25, 1
        %s249 = scalar_select %p248, %s25, 1
        %p250 = scmp.lt.s32.totalorder %s247, 1
        %s251 = scalar_select %p250, %s247, 1
        %s252 = smul.addr %s249, 2
        %s253 = sadd.s32 %s251, %s252
        %s254 = scalar_lea.vmem %s2, %s253
        %s255 = sadd.s32 %s26, %s27
        %s256 = smul.u32 2, %s255
        %s257 = sadd.s32 %s25, %s26
        %p258 = scmp.eq.s32.totalorder %s27, 0
        // Predicated region
        $region37: #{tpu_custom_call.1} parent=31 // pred_check
          %p259 = pneg %p258
        $region38: #{tpu_custom_call.1} parent=31 // pred_check_branch
          %261 = sbr.rel (%p259) target = $region40
        $region39: #{tpu_custom_call.1} parent=31 // pred_region
          %v262 = vlaneseq
          %vm263 = vcmp.ge.s32.totalorder %v262, 0
          %vm264 = vcmp.lt.s32.totalorder %v262, 256
          %vm265 = vmand %vm263, %vm264
          %266 = vst.msk [vmem:[%s243] sm:$0x3] %vm265, 0.0
        $region40: #{tpu_custom_call.1} parent=31 // pred_fallthru
          _
        %v267 = vld [vmem:[%s212] sm:$0xff]
        %v268 = vld [vmem:[%s0] sm:$0xf]
        %270 = vset.pattern.permute.xlu0 0
        %271 = vperm.xlu0 %270, %v268
        %v272 = vpop.permute.xlu0 %271
        %v274 = vunpack.c.l.s4 839922192
        %v275 = vunpack.c.0.s8 %v274
        %v276 = vlaneseq
        %v277 = vshrl.u32 %v276, 7
        %v278 = vsub.s32 %v275, %v277
        %v279 = vrot.slane %v272, %v278
        %v281 = vadd.f32 %v267, %v279
        %v282 = vld [vmem:[%s254] sm:$0x3]
        %v284 = vcombine.high %v281, %v281
        %vm286 = vcmask 1043456
        %v287 = vsel %vm286, %v281, -inf
        %v288 = vrot.slane %v287, 4
        %v289 = vmax.f32 %v287, %v288
        %v290 = vrot.slane %v289, 2
        %v291 = vmax.f32 %v289, %v290
        %v292 = vrot.slane %v291, 1
        %v293 = vmax.f32 %v291, %v292
        %v294 = vsel %vm286, %v284, -inf
        %v295 = vrot.slane %v294, 4
        %v296 = vmax.f32 %v294, %v295
        %v297 = vrot.slane %v296, 2
        %v298 = vmax.f32 %v296, %v297
        %v299 = vrot.slane %v298, 1
        %v300 = vmax.f32 %v298, %v299
        %v303 = vcombine.low %v293, %v300
        %v305 = vsub.f32 %v281, %v303
        %v306 = vmul.f32 %v305, 1.442695
        %v307 = vpow.pop %v306
        %v309 = vcombine.high %v307, %v307
        %v311 = vsel %vm286, %v307, 0.0
        %v312 = vrot.slane %v311, 4
        %v313 = vadd.f32 %v311, %v312
        %v314 = vrot.slane %v313, 2
        %v315 = vadd.f32 %v313, %v314
        %v316 = vrot.slane %v315, 1
        %v317 = vadd.f32 %v315, %v316
        %v318 = vsel %vm286, %v309, 0.0
        %v319 = vrot.slane %v318, 4
        %v320 = vadd.f32 %v318, %v319
        %v321 = vrot.slane %v320, 2
        %v322 = vadd.f32 %v320, %v321
        %v323 = vrot.slane %v322, 1
        %v324 = vadd.f32 %v322, %v323
        %v325 = vlog2.pop %v317
        %v326 = vmul.f32 %v325, 0.6931472
        %v327 = vlog2.pop %v324
        %v328 = vmul.f32 %v327, 0.6931472
        %v329 = vadd.f32 %v293, %v326
        %v330 = vadd.f32 %v300, %v328
        %v331 = vlaneseq
        %v332 = vshrl.u32 %v331, 7
        %v333 = vlaneseq
        %v334 = vshrl.u32 %v333, 7
        %v335 = vsub.s32 0, %v334
        %v336 = vrot.slane %v282, %v335
        %v337 = vlaneseq
        %v338 = vshrl.u32 %v337, 7
        %v339 = vsub.s32 1, %v338
        %v340 = vrot.slane %v282, %v339
        %vm341 = vcmp.eq.s32.totalorder %v332, %v336
        %vm342 = vcmp.eq.s32.totalorder %v332, %v340
        %v343 = vsel %vm341, %v281, 0.0
        %v344 = vsel %vm342, %v284, 0.0
        %v345 = vsel %vm286, %v343, 0.0
        %v346 = vrot.slane %v345, 4
        %v347 = vadd.f32 %v345, %v346
        %v348 = vrot.slane %v347, 2
        %v349 = vadd.f32 %v347, %v348
        %v350 = vrot.slane %v349, 1
        %v351 = vadd.f32 %v349, %v350
        %v352 = vsel %vm286, %v344, 0.0
        %v353 = vrot.slane %v352, 4
        %v354 = vadd.f32 %v352, %v353
        %v355 = vrot.slane %v354, 2
        %v356 = vadd.f32 %v354, %v355
        %v357 = vrot.slane %v356, 1
        %v358 = vadd.f32 %v356, %v357
        %vm359 = vcmp.ge.s32.totalorder %v282, 0
        %vm360 = vcmp.lt.s32.totalorder %v282, 4
        %vm361 = vmand %vm359, %vm360
        %v362 = vsub.f32 %v329, %v351
        %v363 = vsub.f32 %v330, %v358
        %v366 = vcombine.low %v362, %v363
        %v368 = vunpack.c.l.s4 1966171168
        %v369 = vunpack.c.0.s8 %v368
        %v370 = vlaneseq
        %v371 = vshrl.u32 %v370, 7
        %v372 = vsub.s32 %v369, %v371
        %v373 = vrot.slane %v366, %v372
        %v375 = vunpack.c.l.s4 1966171168
        %v376 = vunpack.c.0.s8 %v375
        %v377 = vlaneseq
        %v378 = vshrl.u32 %v377, 7
        %v379 = vsub.s32 %v376, %v378
        %v380 = vrot.slane %v373, %v379
        %v382 = vsel %vm361, %v380, 0.0
        %v383 = vld [vmem:[%s243] sm:$0x3]
        %v384 = vadd.f32 %v383, %v382
        %v385 = vlaneseq
        %vm386 = vcmp.ge.s32.totalorder %v385, 0
        %vm387 = vcmp.lt.s32.totalorder %v385, 256
        %vm388 = vmand %vm386, %vm387
        %389 = vst.msk [vmem:[%s243] sm:$0x3] %vm388, %v384
        %s390 = sand.u32 %s130, 1
        %s391 = scalar_lea.sflag [#allocation4], %s390
        %s392 = sand.u32 %s130, 1
        %s393 = smul.addr %s392, 2
        %s394 = scalar_lea.vmem [#allocation5], %s393
        // Predicated region
        $region41: #{tpu_custom_call.1} parent=31 // pred_check
          %p395 = pneg %p140
        $region42: #{tpu_custom_call.1} parent=31 // pred_check_branch
          %397 = sbr.rel (%p395) target = $region44
        $region43: #{tpu_custom_call.1} parent=31 // pred_region
          %s398 = sadd.s32 %s25, %s26
          %s400 = ssub.s32 32, 32
          %401 = vsyncadd %s391, %s400
          %s402 = smul.addr %s398, 2
          %s403 = smul.addr %s402, 16
          %s404 = scalar_lea.hbm %s3, %s403
          %s406 = sshll.u32 %s394, 4
          %s407 = int_to_ptr.vmem [resolvable:$true] %s406
          %409 = dma.vmem_to_hbm [thread:$0]  %s407, 32, %s404, %s391
        $region44: #{tpu_custom_call.1} parent=31 // pred_fallthru
          _
      $region32: #{tpu_custom_call.1} parent=5 // pred_fallthru
        _
      %p410 = scmp.le.s32.totalorder 2, %s15
      // Predicated region
      $region45: #{tpu_custom_call.1} parent=5 // pred_check
        %p411 = pneg %p410
      $region46: #{tpu_custom_call.1} parent=5 // pred_check_branch
        %413 = sbr.rel (%p411) target = $region48
      $region47: #{tpu_custom_call.1} parent=5 // pred_region
        %s414 = ssub.s32 %s15, 2
        // Predicated region
        $region49: #{tpu_custom_call.1} parent=47 // pred_check
          %p415 = pneg %p146
        $region50: #{tpu_custom_call.1} parent=47 // pred_check_branch
          %417 = sbr.rel (%p415) target = $region52
        $region51: #{tpu_custom_call.1} parent=47 // pred_region
          %s418 = sand.u32 %s131, 1
          %s419 = scalar_lea.sflag [#allocation4], %s418
          %s420 = sand.u32 %s131, 1
          %s421 = smul.addr %s420, 2
          %s422 = scalar_lea.vmem [#allocation5], %s421
          %423 = dma.done %s419, 32
        $region52: #{tpu_custom_call.1} parent=47 // pred_fallthru
          _
      $region48: #{tpu_custom_call.1} parent=5 // pred_fallthru
        _
    $region6: #{tpu_custom_call.1} parent=1 // loop_footer
      %s19 = sadd.s32 1, %s15
    $region7: #{tpu_custom_call.1} parent=1 // loop_footer_branch
      %14 = sbr.rel target = $region3
    $region8: #{tpu_custom_call.1} parent=1 // loop_exit
      _
    %424 = vsyncpa [#allocation3], 1
    %s425 = scalar_lea.sflag [#allocation3], 1
    %426 = vsyncpa %s425, 1
    %427 = vsyncpa [#allocation4], 1
    %s428 = scalar_lea.sflag [#allocation4], 1
    %429 = vsyncpa %s428, 1

</llo_original>
